<compile_context>
chip_gen: v6e
topology: v6e:2x2x1
jax: 0.10.0
libtpu: 0.0.40
codegen_flags: <defaults>
</compile_context>

<pallas_src>
import functools

import jax
import jax.numpy as jnp
from jax import lax
from jax.experimental import pallas as pl
from jax.experimental.pallas import tpu as pltpu

MAX_TILE_L = 8192  # batch elements (lanes) per grid step; multiple of 128.
                   # VMEM per double-buffered input block ~= 2 * 8*8192*4B = 512 KiB,
                   # comfortably inside v5e/v6e/v7x scoped VMEM budgets.


def _pinball_kernel(q_ref, pred_ref, tgt_ref, out_ref, *, n_rows, tile_l):
    i = pl.program_id(0)

    quants = q_ref[...].astype(jnp.float32)      # (Q, 1)
    preds = pred_ref[...].astype(jnp.float32)    # (Q, TILE_L)  (cast in-kernel)
    tgts = tgt_ref[...].astype(jnp.float32)      # (1, TILE_L)

    errors = tgts - preds                        # (Q, TILE_L)
    # max(q*e, (q-1)*e) == q*e + max(-e, 0)  (identical for any q)
    losses = quants * errors + jnp.maximum(-errors, 0.0)

    # Mask out-of-range batch columns (ragged last tile / lane padding).
    col = i * tile_l + lax.broadcasted_iota(jnp.int32, (1, tile_l), 1)
    losses = jnp.where(col < n_rows, losses, 0.0)

    partial = jnp.sum(losses)
    out_ref[...] = jnp.full(out_ref.shape, partial, dtype=jnp.float32)


def pinball_loss(predictions: jax.Array, targets: jax.Array, quantiles: jax.Array) -> jax.Array:
    """Pallas implementation of PinballLoss.forward.

    predictions: (N, Q)   targets: (N,)   quantiles: (Q,)   -> scalar float32
    """
    if predictions.shape[1] != quantiles.shape[0]:
        raise ValueError("Number of quantiles must match the predictions dimension")

    n, nq = predictions.shape

    # Lane-dense layout: batch on the 128-lane axis.  Keep native input dtype
    # (cast to f32 happens inside the kernel).
    preds_t = jnp.transpose(predictions)                    # (Q, N)
    tgts = jnp.reshape(targets, (1, n))                     # (1, N)
    quants = quantiles.astype(jnp.float32).reshape(nq, 1)   # (Q, 1)

    if n >= MAX_TILE_L:
        tile_l = MAX_TILE_L
        n_lanes = n
    else:
        # Single tile: round the lane extent up to a multiple of 128 so the
        # block never exceeds the array.  Pad is < 128 columns (tiny) and the
        # padded columns are masked in-kernel anyway.
        tile_l = max(128, ((n + 127) // 128) * 128)
        n_lanes = tile_l
        if n_lanes != n:
            preds_t = jnp.pad(preds_t, ((0, 0), (0, n_lanes - n)))
            tgts = jnp.pad(tgts, ((0, 0), (0, n_lanes - n)))

    num_tiles = (n_lanes + tile_l - 1) // tile_l

    partials = pl.pallas_call(
        functools.partial(_pinball_kernel, n_rows=n, tile_l=tile_l),
        out_shape=jax.ShapeDtypeStruct((num_tiles, 8, 128), jnp.float32),
        grid_spec=pltpu.PrefetchScalarGridSpec(
            num_scalar_prefetch=0,
            grid=(num_tiles,),
            in_specs=[
                pl.BlockSpec((nq, 1), lambda i: (0, 0)),        # quantiles (resident)
                pl.BlockSpec((nq, tile_l), lambda i: (0, i)),   # predictions.T lane tile
                pl.BlockSpec((1, tile_l), lambda i: (0, i)),    # targets lane tile
            ],
            out_specs=pl.BlockSpec((1, 8, 128), lambda i: (i, 0, 0)),
        ),
        compiler_params=pltpu.CompilerParams(
            dimension_semantics=("parallel",),  # per-tile partials -> both v7x TCs usable
        ),
    )(quants, preds_t, tgts)

    total = jnp.sum(partials[:, 0, 0])
    return total / jnp.float32(n)


def _reference(predictions, targets, quantiles):
    errors = targets[:, None] - predictions
    losses = jnp.maximum(quantiles[None, :] * errors, (quantiles[None, :] - 1.0) * errors)
    return jnp.mean(jnp.sum(losses, axis=1))


if __name__ == "__main__":
    key = jax.random.PRNGKey(0)
    k1, k2 = jax.random.split(key)

    quantiles = jnp.array([0.1, 0.5, 0.9], dtype=jnp.float32)  # module __init__ arg
    N, Q = 200, quantiles.shape[0]  # non-multiple of 128 to exercise the in-kernel mask

    predictions = jax.random.normal(k1, (N, Q), dtype=jnp.float32)
    targets = jax.random.normal(k2, (N,), dtype=jnp.float32)

    out = pinball_loss(predictions, targets, quantiles)
    out = jax.block_until_ready(out)

    ref = _reference(predictions, targets, quantiles)
    assert jnp.allclose(out, ref, rtol=1e-5, atol=1e-6), (out, ref)

    print("KERNEL_OK")
</pallas_src>

<mosaic_0001>
module attributes {stable_mosaic.version = 11 : i64} {
  func.func @_pinball_kernel(%arg0: i32, %arg1: memref<3x1xf32, #tpu.memory_space<vmem>>, %arg2: memref<3x256xf32, #tpu.memory_space<vmem>>, %arg3: memref<1x256xf32, #tpu.memory_space<vmem>>, %arg4: memref<1x8x128xf32, #tpu.memory_space<vmem>>) attributes {dimension_semantics = [#tpu.dimension_semantics<parallel>], iteration_bounds = array<i64: 1>, scalar_prefetch = 0 : i64, scratch_operands = 0 : i64, tpu.core_type = #tpu.core_type<tc>, window_params = [{pipeline_mode = #tpu.pipeline_mode<synchronous>, transform_indices = @transform_0, window_bounds = array<i64: 3, 1>}, {transform_indices = @transform_1, window_bounds = array<i64: 3, 256>}, {transform_indices = @transform_2, window_bounds = array<i64: 1, 256>}, {transform_indices = @transform_3, window_bounds = array<i64: 1, 8, 128>}]} {
    %c0 = arith.constant 0 : index
    %c0_0 = arith.constant 0 : index
    %0 = vector.load %arg1[%c0, %c0_0] : memref<3x1xf32, #tpu.memory_space<vmem>>, vector<3x1xf32>
    %c0_1 = arith.constant 0 : index
    %c0_2 = arith.constant 0 : index
    %1 = vector.load %arg2[%c0_1, %c0_2] : memref<3x256xf32, #tpu.memory_space<vmem>>, vector<3x256xf32>
    %c0_3 = arith.constant 0 : index
    %c0_4 = arith.constant 0 : index
    %2 = vector.load %arg3[%c0_3, %c0_4] : memref<1x256xf32, #tpu.memory_space<vmem>>, vector<1x256xf32>
    %3 = vector.broadcast %2 : vector<1x256xf32> to vector<3x256xf32>
    %4 = arith.subf %3, %1 : vector<3x256xf32>
    %5 = vector.broadcast %0 : vector<3x1xf32> to vector<3x256xf32>
    %6 = arith.mulf %5, %4 : vector<3x256xf32>
    %cst = arith.constant 0.000000e+00 : f32
    %7 = vector.broadcast %cst : f32 to vector<3x256xf32>
    %8 = arith.subf %7, %4 : vector<3x256xf32>
    %cst_5 = arith.constant 0.000000e+00 : f32
    %9 = vector.broadcast %cst_5 : f32 to vector<3x256xf32>
    %10 = arith.maximumf %8, %9 : vector<3x256xf32>
    %11 = arith.addf %6, %10 : vector<3x256xf32>
    %c256_i32 = arith.constant 256 : i32
    %12 = arith.muli %arg0, %c256_i32 : i32
    %13 = tpu.iota {dimensions = array<i32: 1>} : vector<1x256xi32>
    %14 = vector.broadcast %12 : i32 to vector<1x256xi32>
    %15 = arith.addi %14, %13 : vector<1x256xi32>
    %c200_i32 = arith.constant 200 : i32
    %16 = vector.broadcast %c200_i32 : i32 to vector<1x256xi32>
    %17 = arith.cmpi slt, %15, %16 : vector<1x256xi32>
    %cst_6 = arith.constant 0.000000e+00 : f32
    %18 = vector.shape_cast %17 : vector<1x256xi1> to vector<1x256xi1>
    %19 = vector.broadcast %18 : vector<1x256xi1> to vector<3x256xi1>
    %20 = vector.broadcast %cst_6 : f32 to vector<3x256xf32>
    %21 = arith.select %19, %11, %20 : vector<3x256xi1>, vector<3x256xf32>
    %22 = vector.shape_cast %21 : vector<3x256xf32> to vector<1x3x256xf32>
    %cst_7 = arith.constant dense<0.000000e+00> : vector<1xf32>
    %23 = vector.multi_reduction <add>, %22, %cst_7 [1, 2] : vector<1x3x256xf32> to vector<1xf32>
    %24 = vector.shape_cast %23 : vector<1xf32> to vector<1x1x1xf32>
    %25 = vector.extract %24[0, 0, 0] : f32 from vector<1x1x1xf32>
    %26 = vector.broadcast %25 : f32 to vector<1x8x128xf32>
    %c0_8 = arith.constant 0 : index
    %c0_9 = arith.constant 0 : index
    %c0_10 = arith.constant 0 : index
    %27 = vector.load %arg4[%c0_8, %c0_9, %c0_10] : memref<1x8x128xf32, #tpu.memory_space<vmem>>, vector<1x8x128xf32>
    tpu.vector_store %arg4[%c0_8, %c0_9, %c0_10], %26 {strides = array<i32>} : memref<1x8x128xf32, #tpu.memory_space<vmem>>, vector<1x8x128xf32>,
    return
  }
  func.func @transform_0(%arg0: i32) -> (i32, i32) {
    %c0_i32 = arith.constant 0 : i32
    %c0_i32_0 = arith.constant 0 : i32
    %c0_i32_1 = arith.constant 0 : i32
    return %c0_i32, %c0_i32_0 : i32, i32
  }
  func.func @transform_1(%arg0: i32) -> (i32, i32) {
    %c0_i32 = arith.constant 0 : i32
    %c0_i32_0 = arith.constant 0 : i32
    return %c0_i32, %arg0 : i32, i32
  }
  func.func @transform_2(%arg0: i32) -> (i32, i32) {
    %c0_i32 = arith.constant 0 : i32
    %c0_i32_0 = arith.constant 0 : i32
    return %c0_i32, %arg0 : i32, i32
  }
  func.func @transform_3(%arg0: i32) -> (i32, i32, i32) {
    %c0_i32 = arith.constant 0 : i32
    %c0_i32_0 = arith.constant 0 : i32
    %c0_i32_1 = arith.constant 0 : i32
    return %arg0, %c0_i32, %c0_i32_0 : i32, i32, i32
  }
}

</mosaic_0001>

<llo_original>
// kernel: tpu_custom_call.1
$region0: #{tpu_custom_call.1}
  #allocation0 [shape = 'u32[]', space=smem, size = 0x4, offset = 0x4, fixed_abs, tag = 'smem constant byte address 0x4 - core index']
  #allocation1 [shape = 'u32[144,128]{1,0:T(1,128)}', space=vmem, size = 0x12000, scoped, tag = 'internal scratch']
  %s0 = inlined_call_operand.vmem [shape: f32[3,1], index: 0, kind: input, shape index: {}]
  %s1 = inlined_call_operand.hbm [shape: f32[3,256], index: 1, kind: input, shape index: {}]
  %s2 = inlined_call_operand.vmem [shape: f32[1,256], index: 2, kind: input, shape index: {}]
  %s3 = inlined_call_operand.hbm [shape: f32[1,8,128], index: 3, kind: output, shape index: {}]
  %s4 = sld [smem:[#allocation0]]
  $region26: #{tpu_custom_call.1} parent=0
    _
  %s6 = ssub.s32 1, %s4
  %s7 = scalar_select 0, %s6, %s4
  $region1: #{tpu_custom_call.1} parent=0
    #allocation2 [shape = 'u8[4096]{0}', space=vmem, size = 0x1000, scoped, tag = 'input window, operand 1, single buffered']
    #allocation3 [shape = 's32[1]{0}', space=sflag, size = 0x4, scoped, tag = 'scoped memory for tpu_custom_call.1']
    #allocation4 [shape = 's32[1]{0}', space=sflag, size = 0x4, scoped, tag = 'scoped memory for tpu_custom_call.1']
    #allocation5 [shape = 'u8[4096]{0}', space=vmem, size = 0x1000, scoped, tag = 'output window, operand 0, single buffered']
    %8 = vsyncpa [#allocation3], 0
    %9 = vsyncpa [#allocation4], 0
    // Predicated region
    $region2: #{tpu_custom_call.1} parent=1 // pred_check
      _
    $region3: #{tpu_custom_call.1} parent=1 // pred_check_branch
      %11 = sbr.rel (0) target = $region5
    $region4: #{tpu_custom_call.1} parent=1 // pred_region
      _
    $region5: #{tpu_custom_call.1} parent=1 // pred_fallthru
      _
    // Predicated region
    $region6: #{tpu_custom_call.1} parent=1 // pred_check
      _
    $region7: #{tpu_custom_call.1} parent=1 // pred_check_branch
      %13 = sbr.rel (0) target = $region9
    $region8: #{tpu_custom_call.1} parent=1 // pred_region
      %s15 = ssub.s32 128, 128
      %16 = vsyncadd [#allocation3], %s15
      %s18 = sshll.u32 [#allocation2], 4
      %s19 = int_to_ptr.vmem [resolvable:$true] %s18
      %21 = dma.hbm_to_vmem [thread:$0]  %s1, 128, %s19, [#allocation3]
    $region9: #{tpu_custom_call.1} parent=1 // pred_fallthru
      _
    // Predicated region
    $region10: #{tpu_custom_call.1} parent=1 // pred_check
      _
    $region11: #{tpu_custom_call.1} parent=1 // pred_check_branch
      %23 = sbr.rel (0) target = $region13
    $region12: #{tpu_custom_call.1} parent=1 // pred_region
      _
    $region13: #{tpu_custom_call.1} parent=1 // pred_fallthru
      _
    // Predicated region
    $region14: #{tpu_custom_call.1} parent=1 // pred_check
      _
    $region15: #{tpu_custom_call.1} parent=1 // pred_check_branch
      %25 = sbr.rel (0) target = $region17
    $region16: #{tpu_custom_call.1} parent=1 // pred_region
      %26 = dma.done [#allocation3], 128
    $region17: #{tpu_custom_call.1} parent=1 // pred_fallthru
      _
    %v27 = vld [vmem:[%s0] sm:$0x7]
    %v28 = vld [vmem:[#allocation2] sm:$0x77]
    %v29 = vld [vmem:[%s2] sm:$0x3]
    %v31 = vlaneseq
    %v32 = vshrl.u32 %v31, 7
    %v33 = vsub.s32 0, %v32
    %v34 = vrot.slane %v29, %v33
    %v35 = vlaneseq
    %v36 = vshrl.u32 %v35, 7
    %v37 = vsub.s32 1, %v36
    %v38 = vrot.slane %v29, %v37
    %v42 = vcombine.high %v28, %v28
    %v44 = vsub.f32 %v34, %v28
    %v45 = vsub.f32 %v38, %v42
    %47 = vset.pattern.permute.xlu0 0
    %48 = vperm.xlu0 %47, %v27
    %v49 = vpop.permute.xlu0 %48
    %v51 = vmul.f32 %v49, %v44
    %v52 = vmul.f32 %v49, %v45
    %v53 = vsub.f32 0.0, %v44
    %v54 = vsub.f32 0.0, %v45
    %v55 = vmax.f32 %v53, 0.0
    %v56 = vmax.f32 %v54, 0.0
    %v57 = vadd.f32 %v51, %v55
    %v58 = vadd.f32 %v52, %v56
    %s59 = smul.u32 0, 256
    %v60 = vlaneseq
    %v61 = vand.u32 %v60, 127
    %v62 = vadd.s32 %v61, 128
    %v63 = vstv %s59
    %v64 = vadd.s32 %v63, %v61
    %v65 = vadd.s32 %v63, %v62
    %vm66 = vcmp.lt.s32.totalorder %v64, 200
    %vm67 = vcmp.lt.s32.totalorder %v65, 200
    %v68 = vsel %vm66, 1, 0
    %v69 = vsel %vm67, 1, 0
    %vm70 = vcmp.eq.s32.totalorder %v68, 1
    %vm71 = vcmp.eq.s32.totalorder %v69, 1
    %v72 = vsel %vm70, %v57, 0.0
    %v73 = vsel %vm71, %v58, 0.0
    %vm74 = vcmask 1042432
    %v75 = vsel %vm74, %v72, 0.0
    %v76 = vsel %vm74, %v73, 0.0
    %v77 = vadd.f32 %v75, %v76
    %78 = vadd.xlane.f32.xlu0 %v77
    %v79 = vpop.xlane.xlu0 %78
    %v80 = vrot.slane %v79, 4
    %v81 = vadd.f32 %v79, %v80
    %v82 = vrot.slane %v81, 2
    %v83 = vadd.f32 %v81, %v82
    %v84 = vrot.slane %v83, 1
    %v85 = vadd.f32 %v83, %v84
    %s86 = vtos %v85
    %v87 = vstv %s86
    %88 = vst [vmem:[#allocation5] sm:$0xff] %v87
    // Predicated region
    $region18: #{tpu_custom_call.1} parent=1 // pred_check
      _
    $region19: #{tpu_custom_call.1} parent=1 // pred_check_branch
      %90 = sbr.rel (0) target = $region21
    $region20: #{tpu_custom_call.1} parent=1 // pred_region
      %s92 = ssub.s32 128, 128
      %93 = vsyncadd [#allocation4], %s92
      %s95 = sshll.u32 [#allocation5], 4
      %s96 = int_to_ptr.vmem [resolvable:$true] %s95
      %98 = dma.vmem_to_hbm [thread:$0]  %s96, 128, %s3, [#allocation4]
    $region21: #{tpu_custom_call.1} parent=1 // pred_fallthru
      _
    // Predicated region
    $region22: #{tpu_custom_call.1} parent=1 // pred_check
      _
    $region23: #{tpu_custom_call.1} parent=1 // pred_check_branch
      %100 = sbr.rel (0) target = $region25
    $region24: #{tpu_custom_call.1} parent=1 // pred_region
      %101 = dma.done [#allocation4], 128
    $region25: #{tpu_custom_call.1} parent=1 // pred_fallthru
      _
    %102 = vsyncpa [#allocation3], 1
    %103 = vsyncpa [#allocation4], 1

</llo_original>
